<compile_context>
chip_gen: v6e
topology: v6e:2x2x1
jax: 0.10.0
libtpu: 0.0.40
codegen_flags: <defaults>
</compile_context>

<pallas_src>
import jax
import jax.numpy as jnp
from jax import lax
from jax.experimental import pallas as pl
from jax.experimental.pallas import tpu as pltpu


# ----------------------------- VMEM budgeting ------------------------------
def _vmem_capacity_bytes():
    try:
        return int(pltpu.get_tpu_info().vmem_capacity_bytes)
    except Exception:
        pass
    try:
        kind = jax.devices()[0].device_kind.lower()
        if "v5" in kind or "v6" in kind:
            return 128 << 20
    except Exception:
        pass
    return 64 << 20          # conservative fallback (v7x per-TensorCore)


_VMEM_CAP = _vmem_capacity_bytes()
if _VMEM_CAP >= (100 << 20):                 # v5e / v6e: 128 MiB per core
    _VMEM_LIMIT = min(int(0.75 * _VMEM_CAP), 96 << 20)
    _TILE_N = 16384
else:                                         # v7x: 64 MiB per core
    _VMEM_LIMIT = min(int(0.625 * _VMEM_CAP), 40 << 20)
    _TILE_N = 8192

# f32 h1/f/h3 (3 x 256 B) + bf16 matmul copies + double-buffered IO blocks.
_BYTES_PER_POINT = 1280
_N_SINGLE_MAX = max(4096, (_VMEM_LIMIT - (4 << 20)) // _BYTES_PER_POINT)


# ------------------------------- kernels -----------------------------------
def _layer1_vpu(x, w1, b1):
    """relu(W1 @ x + b1), Cin = 3, done as 3 broadcast FMAs on the VPU (f32)."""
    h = (w1[:, 0:1] * x[0:1, :] + w1[:, 1:2] * x[1:2, :]
         + w1[:, 2:3] * x[2:3, :]) + b1
    return jnp.maximum(h, 0.0)


def _bf16(v):
    return v.astype(jnp.bfloat16)


def _make_smooth_fused_kernel(bt, n):
    """Single-pass kernel: `bt` point clouds fused onto the lane axis."""
    nl = bt * n

    def kernel(x_ref, w1_ref, b1_ref, w2_ref, b2_ref,
               w3f_ref, w3g_ref, b3_ref, w4_ref, b4_ref, out_ref):
        x = x_ref[0]                                              # (3, nl) f32
        h1 = _layer1_vpu(x, w1_ref[...], b1_ref[...])             # (64, nl) f32
        f = jnp.dot(w2_ref[...], _bf16(h1),
                    preferred_element_type=jnp.float32) + b2_ref[...]
        # last_act=False on the first MLP -> no ReLU on f.

        b3 = b3_ref[...]
        w3g = w3g_ref[...]
        if bt == 1:
            g = jnp.max(f, axis=1, keepdims=True)                 # (64, 1)
            bias3 = jnp.dot(w3g, _bf16(g),
                            preferred_element_type=jnp.float32) + b3
        else:
            # Segmented max + per-cloud bias broadcast over the fused lane axis.
            col = lax.broadcasted_iota(jnp.int32, (64, nl), 1)
            bias3 = jnp.zeros((64, nl), jnp.float32)
            for j in range(bt):
                m = jnp.logical_and(col >= j * n, col < (j + 1) * n)
                g_j = jnp.max(jnp.where(m, f, -jnp.inf), axis=1, keepdims=True)
                b_j = jnp.dot(w3g, _bf16(g_j),
                              preferred_element_type=jnp.float32) + b3
                bias3 = jnp.where(m, b_j, bias3)

        h3 = jnp.maximum(
            jnp.dot(w3f_ref[...], _bf16(f),
                    preferred_element_type=jnp.float32) + bias3, 0.0)
        d = jnp.maximum(
            jnp.dot(w4_ref[...], _bf16(h3),
                    preferred_element_type=jnp.float32) + b4_ref[...], 0.0)
        # TODO(synk): if the real SCNet MLP omits the final ReLU (or carries a
        # non-identity BatchNorm), adjust here -- the MLP class body was not given.
        out_ref[0] = (x + d).astype(out_ref.dtype)

    return kernel


def _make_gmax_kernel(n_tiles, n_valid_last, tn):
    """Large-N call 1: per-channel max g via accumulate-in-output over N tiles."""
    masked_last = n_valid_last != tn

    def kernel(x_ref, w1_ref, b1_ref, w2_ref, b2_ref, g_ref):
        t = pl.program_id(1)
        x = x_ref[0]                                              # (3, tn) f32
        h1 = _layer1_vpu(x, w1_ref[...], b1_ref[...])
        f = jnp.dot(w2_ref[...], _bf16(h1),
                    preferred_element_type=jnp.float32) + b2_ref[...]

        @pl.when(t == 0)
        def _():
            g_ref[...] = jnp.full(g_ref.shape, -jnp.inf, g_ref.dtype)

        if masked_last:
            @pl.when(t < n_tiles - 1)
            def _():
                g_ref[0] = jnp.maximum(g_ref[0],
                                       jnp.max(f, axis=1, keepdims=True))

            @pl.when(t == n_tiles - 1)
            def _():   # padding mask only on the last (partial) tile
                col = lax.broadcasted_iota(jnp.int32, f.shape, 1)
                fm = jnp.where(col < n_valid_last, f, -jnp.inf)
                g_ref[0] = jnp.maximum(g_ref[0],
                                       jnp.max(fm, axis=1, keepdims=True))
        else:
            g_ref[0] = jnp.maximum(g_ref[0], jnp.max(f, axis=1, keepdims=True))

    return kernel


def _smooth_tile_kernel(x_ref, g_ref, w1_ref, b1_ref, w2_ref, b2_ref,
                        w3f_ref, w3g_ref, b3_ref, w4_ref, b4_ref, out_ref):
    """Large-N call 2: full layer stack per N tile, consuming precomputed g."""
    x = x_ref[0]                                                  # (3, tn) f32
    h1 = _layer1_vpu(x, w1_ref[...], b1_ref[...])
    f = jnp.dot(w2_ref[...], _bf16(h1),
                preferred_element_type=jnp.float32) + b2_ref[...]
    bias3 = jnp.dot(w3g_ref[...], _bf16(g_ref[0]),
                    preferred_element_type=jnp.float32) + b3_ref[...]
    h3 = jnp.maximum(
        jnp.dot(w3f_ref[...], _bf16(f),
                preferred_element_type=jnp.float32) + bias3, 0.0)
    d = jnp.maximum(
        jnp.dot(w4_ref[...], _bf16(h3),
                preferred_element_type=jnp.float32) + b4_ref[...], 0.0)
    out_ref[0] = (x + d).astype(out_ref.dtype)


# ------------------------------- wrapper ------------------------------------
def _pick_batch_tile(batch, n):
    """How many clouds to fuse onto the lane axis per grid step (small N)."""
    cap = min(batch, 16, max(1, 512 // max(n, 1)))
    bt = max(cap, 1)
    while batch % bt:
        bt -= 1
    return bt


def _full_spec(arr, ngrid):
    zeros = (0,) * arr.ndim
    if ngrid == 1:
        return pl.BlockSpec(arr.shape, lambda b: zeros)
    return pl.BlockSpec(arr.shape, lambda b, t: zeros)


def smooth_forward(xyz, params, *, force_tile_n=None):
    """xyz: (B, 3, N) float32 — PyTorch Conv1d NCL layout, kept as-is."""
    xyz = xyz.astype(jnp.float32)
    B, C, N = xyz.shape
    assert C == 3
    w1, b1, w2, b2, w3, b3, w4, b4 = params
    assert w3.shape == (64, 128)
    w3f, w3g = w3[:, :64], w3[:, 64:]             # split-W3: acts on f / on g
    # bf16 operands for every MXU matmul (f32 accumulation inside the kernel).
    w2b, w3fb, w3gb, w4b = (w.astype(jnp.bfloat16) for w in (w2, w3f, w3g, w4))
    weights = (w1, b1, w2b, b2, w3fb, w3gb, b3, w4b, b4)

    flops_pt = 2 * (3 * 64 + 64 * 64 + 64 * 64 + 64 * 3)
    cost = pl.CostEstimate(
        flops=flops_pt * B * N + 2 * 64 * 64 * B,
        transcendentals=0,
        bytes_accessed=2 * int(xyz.size) * 4 + sum(int(p.size) * 4 for p in params))

    tile_n = force_tile_n
    if tile_n is None and N > _N_SINGLE_MAX:
        tile_n = _TILE_N

    if tile_n is None:
        # -------- single-pass path: bt clouds fused onto the lane axis ------
        bt = _pick_batch_tile(B, N)
        G, nl = B // bt, bt * N
        if bt > 1:
            xp = xyz.reshape(G, bt, 3, N).transpose(0, 2, 1, 3).reshape(G, 3, nl)
        else:
            xp = xyz

        out = pl.pallas_call(
            _make_smooth_fused_kernel(bt, N),
            out_shape=jax.ShapeDtypeStruct((G, 3, nl), jnp.float32),
            grid_spec=pltpu.PrefetchScalarGridSpec(
                num_scalar_prefetch=0,
                grid=(G,),
                in_specs=[pl.BlockSpec((1, 3, nl), lambda b: (b, 0, 0))]
                         + [_full_spec(w, 1) for w in weights],
                out_specs=pl.BlockSpec((1, 3, nl), lambda b: (b, 0, 0)),
            ),
            compiler_params=pltpu.CompilerParams(
                dimension_semantics=("parallel",),
                vmem_limit_bytes=_VMEM_LIMIT),
            cost_estimate=cost,
        )(xp, *weights)
        if bt > 1:
            out = out.reshape(G, 3, bt, N).transpose(0, 2, 1, 3).reshape(B, 3, N)
        return out

    # -------- large-N path: (1) g max-reduce call, (2) parallel tiled main ---
    tn = int(tile_n)
    n_tiles = pl.cdiv(N, tn)
    n_pad = n_tiles * tn
    xp = xyz if n_pad == N else jnp.pad(xyz, ((0, 0), (0, 0), (0, n_pad - N)))
    n_valid_last = N - (n_tiles - 1) * tn

    x_spec = pl.BlockSpec((1, 3, tn), lambda b, t: (b, 0, t))

    g = pl.pallas_call(
        _make_gmax_kernel(n_tiles, n_valid_last, tn),
        out_shape=jax.ShapeDtypeStruct((B, 64, 1), jnp.float32),
        grid_spec=pltpu.PrefetchScalarGridSpec(
            num_scalar_prefetch=0,
            grid=(B, n_tiles),
            in_specs=[x_spec] + [_full_spec(w, 2) for w in (w1, b1, w2b, b2)],
            out_specs=pl.BlockSpec((1, 64, 1), lambda b, t: (b, 0, 0)),
        ),
        compiler_params=pltpu.CompilerParams(
            dimension_semantics=("parallel", "arbitrary"),
            vmem_limit_bytes=_VMEM_LIMIT),
        cost_estimate=pl.CostEstimate(
            flops=2 * (3 * 64 + 64 * 64) * B * N, transcendentals=0,
            bytes_accessed=int(xp.size) * 4 + B * 64 * 4),
    )(xp, w1, b1, w2b, b2)

    out = pl.pallas_call(
        _smooth_tile_kernel,
        out_shape=jax.ShapeDtypeStruct((B, 3, n_pad), jnp.float32),
        grid_spec=pltpu.PrefetchScalarGridSpec(
            num_scalar_prefetch=0,
            grid=(B, n_tiles),
            in_specs=[x_spec,
                      pl.BlockSpec((1, 64, 1), lambda b, t: (b, 0, 0))]
                     + [_full_spec(w, 2) for w in weights],
            out_specs=pl.BlockSpec((1, 3, tn), lambda b, t: (b, 0, t)),
        ),
        compiler_params=pltpu.CompilerParams(
            dimension_semantics=("parallel", "parallel"),
            vmem_limit_bytes=_VMEM_LIMIT),
        cost_estimate=cost,
    )(xp, g, *weights)
    return out if n_pad == N else out[:, :, :N]


# --------------------------- params & reference -----------------------------
def init_params(key):
    ks = jax.random.split(key, 8)

    def w(k, shape):
        return 0.1 * jax.random.normal(k, shape, dtype=jnp.float32)

    # Conv1d(Cin, Cout, 1) weights stored as (Cout, Cin) (= torch weight with
    # the kernel dim squeezed); biases as (Cout, 1) columns.
    w1 = w(ks[0], (64, 3));   b1 = w(ks[1], (64, 1))
    w2 = w(ks[2], (64, 64));  b2 = w(ks[3], (64, 1))
    w3 = w(ks[4], (64, 128)); b3 = w(ks[5], (64, 1))
    w4 = w(ks[6], (3, 64));   b4 = w(ks[7], (3, 1))
    return (w1, b1, w2, b2, w3, b3, w4, b4)


def smooth_reference(xyz, params):
    """Pure-JAX f32 reference with the exact PyTorch dataflow (cat + 128-wide matmul)."""
    w1, b1, w2, b2, w3, b3, w4, b4 = params
    h1 = jnp.maximum(jnp.einsum('ck,bkn->bcn', w1, xyz) + b1[None], 0.0)
    f = jnp.einsum('cd,bdn->bcn', w2, h1) + b2[None]
    g = jnp.max(f, axis=-1, keepdims=True)
    fg = jnp.concatenate([f, jnp.broadcast_to(g, f.shape)], axis=1)
    h2 = jnp.maximum(jnp.einsum('cd,bdn->bcn', w3, fg) + b3[None], 0.0)
    d = jnp.maximum(jnp.einsum('cd,bdn->bcn', w4, h2) + b4[None], 0.0)
    return xyz + d


if __name__ == "__main__":
    key = jax.random.PRNGKey(0)
    pkey, k1, k2, k3, k4 = jax.random.split(key, 5)
    params = init_params(pkey)
    # bf16 MXU operands (f32 accumulation) -> slightly looser tolerance vs f32 ref.
    TOL = dict(atol=2e-2, rtol=2e-2)

    # Case 1: tiny point clouds (B=2, N=16) -> fused single-pass path (bt=2).
    xyz1 = jax.random.normal(k1, (2, 3, 16), dtype=jnp.float32)
    out1 = jax.block_until_ready(smooth_forward(xyz1, params))
    assert out1.shape == xyz1.shape, out1.shape
    assert jnp.allclose(out1, smooth_reference(xyz1, params), **TOL)

    # Case 2: lane-dense fused path (8 clouds packed -> 128-lane slab).
    xyz2 = jax.random.normal(k2, (8, 3, 16), dtype=jnp.float32)
    out2 = jax.block_until_ready(smooth_forward(xyz2, params))
    assert jnp.allclose(out2, smooth_reference(xyz2, params), **TOL)

    # Case 3: odd batch / non-128-multiple fused slab (bt=5, nl=240).
    xyz3 = jax.random.normal(k3, (5, 3, 48), dtype=jnp.float32)
    out3 = jax.block_until_ready(smooth_forward(xyz3, params))
    assert jnp.allclose(out3, smooth_reference(xyz3, params), **TOL)

    # Case 4: exercise the large-N two-call tiled path at a small shape
    # (N=200 with a forced 128-point tile; checks padding + masked last-tile max).
    xyz4 = jax.random.normal(k4, (2, 3, 200), dtype=jnp.float32)
    out4 = jax.block_until_ready(smooth_forward(xyz4, params, force_tile_n=128))
    assert jnp.allclose(out4, smooth_reference(xyz4, params), **TOL)

    print("KERNEL_OK")
</pallas_src>

<mosaic_0001>
module attributes {stable_mosaic.version = 11 : i64} {
  func.func @kernel(%arg0: i32, %arg1: memref<1x3x32xf32, #tpu.memory_space<vmem>>, %arg2: memref<64x3xf32, #tpu.memory_space<vmem>>, %arg3: memref<64x1xf32, #tpu.memory_space<vmem>>, %arg4: memref<64x64xbf16, #tpu.memory_space<vmem>>, %arg5: memref<64x1xf32, #tpu.memory_space<vmem>>, %arg6: memref<64x64xbf16, #tpu.memory_space<vmem>>, %arg7: memref<64x64xbf16, #tpu.memory_space<vmem>>, %arg8: memref<64x1xf32, #tpu.memory_space<vmem>>, %arg9: memref<3x64xbf16, #tpu.memory_space<vmem>>, %arg10: memref<3x1xf32, #tpu.memory_space<vmem>>, %arg11: memref<1x3x32xf32, #tpu.memory_space<vmem>>) attributes {dimension_semantics = [#tpu.dimension_semantics<parallel>], iteration_bounds = array<i64: 1>, scalar_prefetch = 0 : i64, scratch_operands = 0 : i64, tpu.core_type = #tpu.core_type<tc>, window_params = [{transform_indices = @transform_0, window_bounds = array<i64: 1, 3, 32>}, {pipeline_mode = #tpu.pipeline_mode<synchronous>, transform_indices = @transform_1, window_bounds = array<i64: 64, 3>}, {pipeline_mode = #tpu.pipeline_mode<synchronous>, transform_indices = @transform_2, window_bounds = array<i64: 64, 1>}, {pipeline_mode = #tpu.pipeline_mode<synchronous>, transform_indices = @transform_3, window_bounds = array<i64: 64, 64>}, {pipeline_mode = #tpu.pipeline_mode<synchronous>, transform_indices = @transform_4, window_bounds = array<i64: 64, 1>}, {pipeline_mode = #tpu.pipeline_mode<synchronous>, transform_indices = @transform_5, window_bounds = array<i64: 64, 64>}, {pipeline_mode = #tpu.pipeline_mode<synchronous>, transform_indices = @transform_6, window_bounds = array<i64: 64, 64>}, {pipeline_mode = #tpu.pipeline_mode<synchronous>, transform_indices = @transform_7, window_bounds = array<i64: 64, 1>}, {pipeline_mode = #tpu.pipeline_mode<synchronous>, transform_indices = @transform_8, window_bounds = array<i64: 3, 64>}, {pipeline_mode = #tpu.pipeline_mode<synchronous>, transform_indices = @transform_9, window_bounds = array<i64: 3, 1>}, {transform_indices = @transform_10, window_bounds = array<i64: 1, 3, 32>}]} {
    %c0 = arith.constant 0 : index
    %c0_0 = arith.constant 0 : index
    %c0_1 = arith.constant 0 : index
    %0 = vector.load %arg1[%c0, %c0_0, %c0_1] : memref<1x3x32xf32, #tpu.memory_space<vmem>>, vector<1x3x32xf32>
    %1 = vector.shape_cast %0 : vector<1x3x32xf32> to vector<3x32xf32>
    %c0_2 = arith.constant 0 : index
    %c0_3 = arith.constant 0 : index
    %2 = vector.load %arg2[%c0_2, %c0_3] : memref<64x3xf32, #tpu.memory_space<vmem>>, vector<64x3xf32>
    %c0_4 = arith.constant 0 : index
    %c0_5 = arith.constant 0 : index
    %3 = vector.load %arg3[%c0_4, %c0_5] : memref<64x1xf32, #tpu.memory_space<vmem>>, vector<64x1xf32>
    %4 = vector.extract_strided_slice %2 {offsets = [0, 0], sizes = [64, 1], strides = [1, 1]} : vector<64x3xf32> to vector<64x1xf32>
    %5 = vector.extract_strided_slice %1 {offsets = [0, 0], sizes = [1, 32], strides = [1, 1]} : vector<3x32xf32> to vector<1x32xf32>
    %6 = vector.broadcast %4 : vector<64x1xf32> to vector<64x32xf32>
    %7 = vector.broadcast %5 : vector<1x32xf32> to vector<64x32xf32>
    %8 = arith.mulf %6, %7 : vector<64x32xf32>
    %9 = vector.extract_strided_slice %2 {offsets = [0, 1], sizes = [64, 1], strides = [1, 1]} : vector<64x3xf32> to vector<64x1xf32>
    %10 = vector.extract_strided_slice %1 {offsets = [1, 0], sizes = [1, 32], strides = [1, 1]} : vector<3x32xf32> to vector<1x32xf32>
    %11 = vector.broadcast %9 : vector<64x1xf32> to vector<64x32xf32>
    %12 = vector.broadcast %10 : vector<1x32xf32> to vector<64x32xf32>
    %13 = arith.mulf %11, %12 : vector<64x32xf32>
    %14 = arith.addf %8, %13 : vector<64x32xf32>
    %15 = vector.extract_strided_slice %2 {offsets = [0, 2], sizes = [64, 1], strides = [1, 1]} : vector<64x3xf32> to vector<64x1xf32>
    %16 = vector.extract_strided_slice %1 {offsets = [2, 0], sizes = [1, 32], strides = [1, 1]} : vector<3x32xf32> to vector<1x32xf32>
    %17 = vector.broadcast %15 : vector<64x1xf32> to vector<64x32xf32>
    %18 = vector.broadcast %16 : vector<1x32xf32> to vector<64x32xf32>
    %19 = arith.mulf %17, %18 : vector<64x32xf32>
    %20 = arith.addf %14, %19 : vector<64x32xf32>
    %21 = vector.broadcast %3 : vector<64x1xf32> to vector<64x32xf32>
    %22 = arith.addf %20, %21 : vector<64x32xf32>
    %cst = arith.constant 0.000000e+00 : f32
    %23 = vector.broadcast %cst : f32 to vector<64x32xf32>
    %24 = arith.maximumf %22, %23 : vector<64x32xf32>
    %c0_6 = arith.constant 0 : index
    %c0_7 = arith.constant 0 : index
    %25 = vector.load %arg4[%c0_6, %c0_7] : memref<64x64xbf16, #tpu.memory_space<vmem>>, vector<64x64xbf16>
    %26 = arith.truncf %24 : vector<64x32xf32> to vector<64x32xbf16>
    %cst_8 = arith.constant dense<0.000000e+00> : vector<64x32xf32>
    %27 = tpu.matmul %25, %26, %cst_8 {dimension_numbers = #tpu.dot_dimension_numbers<[1], [0], [0], [1], [0, 0, 1, 1], [], []>} : vector<64x64xbf16>, vector<64x32xbf16>, vector<64x32xf32> -> vector<64x32xf32>
    %c0_9 = arith.constant 0 : index
    %c0_10 = arith.constant 0 : index
    %28 = vector.load %arg5[%c0_9, %c0_10] : memref<64x1xf32, #tpu.memory_space<vmem>>, vector<64x1xf32>
    %29 = vector.broadcast %28 : vector<64x1xf32> to vector<64x32xf32>
    %30 = arith.addf %27, %29 : vector<64x32xf32>
    %c0_11 = arith.constant 0 : index
    %c0_12 = arith.constant 0 : index
    %31 = vector.load %arg8[%c0_11, %c0_12] : memref<64x1xf32, #tpu.memory_space<vmem>>, vector<64x1xf32>
    %c0_13 = arith.constant 0 : index
    %c0_14 = arith.constant 0 : index
    %32 = vector.load %arg7[%c0_13, %c0_14] : memref<64x64xbf16, #tpu.memory_space<vmem>>, vector<64x64xbf16>
    %33 = tpu.iota {dimensions = array<i32: 1>} : vector<64x32xi32>
    %cst_15 = arith.constant 0.000000e+00 : f32
    %34 = vector.broadcast %cst_15 : f32 to vector<64x32xf32>
    %c0_i32 = arith.constant 0 : i32
    %35 = vector.broadcast %c0_i32 : i32 to vector<64x32xi32>
    %36 = arith.cmpi sge, %33, %35 : vector<64x32xi32>
    %c16_i32 = arith.constant 16 : i32
    %37 = vector.broadcast %c16_i32 : i32 to vector<64x32xi32>
    %38 = arith.cmpi slt, %33, %37 : vector<64x32xi32>
    %39 = arith.andi %36, %38 : vector<64x32xi1>
    %cst_16 = arith.constant 0xFF800000 : f32
    %40 = vector.broadcast %cst_16 : f32 to vector<64x32xf32>
    %41 = arith.select %39, %30, %40 : vector<64x32xi1>, vector<64x32xf32>
    %cst_17 = arith.constant dense<0xFF800000> : vector<64xf32>
    %42 = vector.multi_reduction <maximumf>, %41, %cst_17 [1] : vector<64x32xf32> to vector<64xf32>
    %43 = vector.shape_cast %42 : vector<64xf32> to vector<64x1xf32>
    %44 = arith.truncf %43 : vector<64x1xf32> to vector<64x1xbf16>
    %cst_18 = arith.constant dense<0.000000e+00> : vector<64x1xf32>
    %45 = tpu.matmul %32, %44, %cst_18 {dimension_numbers = #tpu.dot_dimension_numbers<[1], [0], [0], [1], [0, 0, 1, 1], [], []>} : vector<64x64xbf16>, vector<64x1xbf16>, vector<64x1xf32> -> vector<64x1xf32>
    %46 = arith.addf %45, %31 : vector<64x1xf32>
    %47 = vector.shape_cast %46 : vector<64x1xf32> to vector<64x1xf32>
    %48 = vector.broadcast %47 : vector<64x1xf32> to vector<64x32xf32>
    %49 = arith.select %39, %48, %34 : vector<64x32xi1>, vector<64x32xf32>
    %c16_i32_19 = arith.constant 16 : i32
    %50 = vector.broadcast %c16_i32_19 : i32 to vector<64x32xi32>
    %51 = arith.cmpi sge, %33, %50 : vector<64x32xi32>
    %c32_i32 = arith.constant 32 : i32
    %52 = vector.broadcast %c32_i32 : i32 to vector<64x32xi32>
    %53 = arith.cmpi slt, %33, %52 : vector<64x32xi32>
    %54 = arith.andi %51, %53 : vector<64x32xi1>
    %cst_20 = arith.constant 0xFF800000 : f32
    %55 = vector.broadcast %cst_20 : f32 to vector<64x32xf32>
    %56 = arith.select %54, %30, %55 : vector<64x32xi1>, vector<64x32xf32>
    %cst_21 = arith.constant dense<0xFF800000> : vector<64xf32>
    %57 = vector.multi_reduction <maximumf>, %56, %cst_21 [1] : vector<64x32xf32> to vector<64xf32>
    %58 = vector.shape_cast %57 : vector<64xf32> to vector<64x1xf32>
    %59 = arith.truncf %58 : vector<64x1xf32> to vector<64x1xbf16>
    %cst_22 = arith.constant dense<0.000000e+00> : vector<64x1xf32>
    %60 = tpu.matmul %32, %59, %cst_22 {dimension_numbers = #tpu.dot_dimension_numbers<[1], [0], [0], [1], [0, 0, 1, 1], [], []>} : vector<64x64xbf16>, vector<64x1xbf16>, vector<64x1xf32> -> vector<64x1xf32>
    %61 = arith.addf %60, %31 : vector<64x1xf32>
    %62 = vector.shape_cast %61 : vector<64x1xf32> to vector<64x1xf32>
    %63 = vector.broadcast %62 : vector<64x1xf32> to vector<64x32xf32>
    %64 = arith.select %54, %63, %49 : vector<64x32xi1>, vector<64x32xf32>
    %c0_23 = arith.constant 0 : index
    %c0_24 = arith.constant 0 : index
    %65 = vector.load %arg6[%c0_23, %c0_24] : memref<64x64xbf16, #tpu.memory_space<vmem>>, vector<64x64xbf16>
    %66 = arith.truncf %30 : vector<64x32xf32> to vector<64x32xbf16>
    %cst_25 = arith.constant dense<0.000000e+00> : vector<64x32xf32>
    %67 = tpu.matmul %65, %66, %cst_25 {dimension_numbers = #tpu.dot_dimension_numbers<[1], [0], [0], [1], [0, 0, 1, 1], [], []>} : vector<64x64xbf16>, vector<64x32xbf16>, vector<64x32xf32> -> vector<64x32xf32>
    %68 = arith.addf %67, %64 : vector<64x32xf32>
    %cst_26 = arith.constant 0.000000e+00 : f32
    %69 = vector.broadcast %cst_26 : f32 to vector<64x32xf32>
    %70 = arith.maximumf %68, %69 : vector<64x32xf32>
    %c0_27 = arith.constant 0 : index
    %c0_28 = arith.constant 0 : index
    %71 = vector.load %arg9[%c0_27, %c0_28] : memref<3x64xbf16, #tpu.memory_space<vmem>>, vector<3x64xbf16>
    %72 = arith.truncf %70 : vector<64x32xf32> to vector<64x32xbf16>
    %cst_29 = arith.constant dense<0.000000e+00> : vector<3x32xf32>
    %73 = tpu.matmul %71, %72, %cst_29 {dimension_numbers = #tpu.dot_dimension_numbers<[1], [0], [0], [1], [0, 0, 1, 1], [], []>} : vector<3x64xbf16>, vector<64x32xbf16>, vector<3x32xf32> -> vector<3x32xf32>
    %c0_30 = arith.constant 0 : index
    %c0_31 = arith.constant 0 : index
    %74 = vector.load %arg10[%c0_30, %c0_31] : memref<3x1xf32, #tpu.memory_space<vmem>>, vector<3x1xf32>
    %75 = vector.broadcast %74 : vector<3x1xf32> to vector<3x32xf32>
    %76 = arith.addf %73, %75 : vector<3x32xf32>
    %cst_32 = arith.constant 0.000000e+00 : f32
    %77 = vector.broadcast %cst_32 : f32 to vector<3x32xf32>
    %78 = arith.maximumf %76, %77 : vector<3x32xf32>
    %79 = arith.addf %1, %78 : vector<3x32xf32>
    %c0_33 = arith.constant 0 : index
    %c0_34 = arith.constant 0 : index
    %c0_35 = arith.constant 0 : index
    %80 = vector.load %arg11[%c0_33, %c0_34, %c0_35] : memref<1x3x32xf32, #tpu.memory_space<vmem>>, vector<1x3x32xf32>
    %81 = vector.shape_cast %80 : vector<1x3x32xf32> to vector<3x32xf32>
    %82 = vector.shape_cast %79 : vector<3x32xf32> to vector<1x3x32xf32>
    tpu.vector_store %arg11[%c0_33, %c0_34, %c0_35], %82 {strides = array<i32>} : memref<1x3x32xf32, #tpu.memory_space<vmem>>, vector<1x3x32xf32>,
    return
  }
  func.func @transform_0(%arg0: i32) -> (i32, i32, i32) {
    %c0_i32 = arith.constant 0 : i32
    %c0_i32_0 = arith.constant 0 : i32
    %c0_i32_1 = arith.constant 0 : i32
    return %arg0, %c0_i32, %c0_i32_0 : i32, i32, i32
  }
  func.func @transform_1(%arg0: i32) -> (i32, i32) {
    %c0_i32 = arith.constant 0 : i32
    %c0_i32_0 = arith.constant 0 : i32
    %c0_i32_1 = arith.constant 0 : i32
    return %c0_i32, %c0_i32_0 : i32, i32
  }
  func.func @transform_2(%arg0: i32) -> (i32, i32) {
    %c0_i32 = arith.constant 0 : i32
    %c0_i32_0 = arith.constant 0 : i32
    %c0_i32_1 = arith.constant 0 : i32
    return %c0_i32, %c0_i32_0 : i32, i32
  }
  func.func @transform_3(%arg0: i32) -> (i32, i32) {
    %c0_i32 = arith.constant 0 : i32
    %c0_i32_0 = arith.constant 0 : i32
    %c0_i32_1 = arith.constant 0 : i32
    return %c0_i32, %c0_i32_0 : i32, i32
  }
  func.func @transform_4(%arg0: i32) -> (i32, i32) {
    %c0_i32 = arith.constant 0 : i32
    %c0_i32_0 = arith.constant 0 : i32
    %c0_i32_1 = arith.constant 0 : i32
    return %c0_i32, %c0_i32_0 : i32, i32
  }
  func.func @transform_5(%arg0: i32) -> (i32, i32) {
    %c0_i32 = arith.constant 0 : i32
    %c0_i32_0 = arith.constant 0 : i32
    %c0_i32_1 = arith.constant 0 : i32
    return %c0_i32, %c0_i32_0 : i32, i32
  }
  func.func @transform_6(%arg0: i32) -> (i32, i32) {
    %c0_i32 = arith.constant 0 : i32
    %c0_i32_0 = arith.constant 0 : i32
    %c0_i32_1 = arith.constant 0 : i32
    return %c0_i32, %c0_i32_0 : i32, i32
  }
  func.func @transform_7(%arg0: i32) -> (i32, i32) {
    %c0_i32 = arith.constant 0 : i32
    %c0_i32_0 = arith.constant 0 : i32
    %c0_i32_1 = arith.constant 0 : i32
    return %c0_i32, %c0_i32_0 : i32, i32
  }
  func.func @transform_8(%arg0: i32) -> (i32, i32) {
    %c0_i32 = arith.constant 0 : i32
    %c0_i32_0 = arith.constant 0 : i32
    %c0_i32_1 = arith.constant 0 : i32
    return %c0_i32, %c0_i32_0 : i32, i32
  }
  func.func @transform_9(%arg0: i32) -> (i32, i32) {
    %c0_i32 = arith.constant 0 : i32
    %c0_i32_0 = arith.constant 0 : i32
    %c0_i32_1 = arith.constant 0 : i32
    return %c0_i32, %c0_i32_0 : i32, i32
  }
  func.func @transform_10(%arg0: i32) -> (i32, i32, i32) {
    %c0_i32 = arith.constant 0 : i32
    %c0_i32_0 = arith.constant 0 : i32
    %c0_i32_1 = arith.constant 0 : i32
    return %arg0, %c0_i32, %c0_i32_0 : i32, i32, i32
  }
}

</mosaic_0001>

<llo_original>
// kernel: tpu_custom_call.1
$region0: #{tpu_custom_call.1}
  #allocation0 [shape = 'u32[]', space=smem, size = 0x4, offset = 0x4, fixed_abs, tag = 'smem constant byte address 0x4 - core index']
  #allocation1 [shape = 'u32[144,128]{1,0:T(1,128)}', space=vmem, size = 0x12000, scoped, tag = 'internal scratch']
  %s0 = inlined_call_operand.vmem [shape: f32[1,3,32], index: 0, kind: input, shape index: {}]
  %s1 = inlined_call_operand.vmem [shape: f32[64,3], index: 1, kind: input, shape index: {}]
  %s2 = inlined_call_operand.vmem [shape: f32[64,1], index: 2, kind: input, shape index: {}]
  %s3 = inlined_call_operand.vmem [shape: bf16[64,64], index: 3, kind: input, shape index: {}]
  %s4 = inlined_call_operand.vmem [shape: f32[64,1], index: 4, kind: input, shape index: {}]
  %s5 = inlined_call_operand.vmem [shape: bf16[64,64], index: 5, kind: input, shape index: {}]
  %s6 = inlined_call_operand.vmem [shape: bf16[64,64], index: 6, kind: input, shape index: {}]
  %s7 = inlined_call_operand.vmem [shape: f32[64,1], index: 7, kind: input, shape index: {}]
  %s8 = inlined_call_operand.vmem [shape: bf16[3,64], index: 8, kind: input, shape index: {}]
  %s9 = inlined_call_operand.vmem [shape: f32[3,1], index: 9, kind: input, shape index: {}]
  %s10 = inlined_call_operand.vmem [shape: f32[1,3,32], index: 10, kind: output, shape index: {}]
  %s11 = sld [smem:[#allocation0]]
  $region50: #{tpu_custom_call.1} parent=0
    _
  %s13 = ssub.s32 1, %s11
  %s14 = scalar_select 0, %s13, %s11
  // Predicated region
  $region2: #{tpu_custom_call.1} parent=0 // pred_check
    _
  $region3: #{tpu_custom_call.1} parent=0 // pred_check_branch
    %16 = sbr.rel (0) target = $region5
  $region4: #{tpu_custom_call.1} parent=0 // pred_region
    _
  $region5: #{tpu_custom_call.1} parent=0 // pred_fallthru
    _
  // Predicated region
  $region6: #{tpu_custom_call.1} parent=0 // pred_check
    _
  $region7: #{tpu_custom_call.1} parent=0 // pred_check_branch
    %18 = sbr.rel (0) target = $region9
  $region8: #{tpu_custom_call.1} parent=0 // pred_region
    _
  $region9: #{tpu_custom_call.1} parent=0 // pred_fallthru
    _
  // Predicated region
  $region10: #{tpu_custom_call.1} parent=0 // pred_check
    _
  $region11: #{tpu_custom_call.1} parent=0 // pred_check_branch
    %20 = sbr.rel (0) target = $region13
  $region12: #{tpu_custom_call.1} parent=0 // pred_region
    _
  $region13: #{tpu_custom_call.1} parent=0 // pred_fallthru
    _
  // Predicated region
  $region14: #{tpu_custom_call.1} parent=0 // pred_check
    _
  $region15: #{tpu_custom_call.1} parent=0 // pred_check_branch
    %22 = sbr.rel (0) target = $region17
  $region16: #{tpu_custom_call.1} parent=0 // pred_region
    _
  $region17: #{tpu_custom_call.1} parent=0 // pred_fallthru
    _
  // Predicated region
  $region18: #{tpu_custom_call.1} parent=0 // pred_check
    _
  $region19: #{tpu_custom_call.1} parent=0 // pred_check_branch
    %24 = sbr.rel (0) target = $region21
  $region20: #{tpu_custom_call.1} parent=0 // pred_region
    _
  $region21: #{tpu_custom_call.1} parent=0 // pred_fallthru
    _
  // Predicated region
  $region22: #{tpu_custom_call.1} parent=0 // pred_check
    _
  $region23: #{tpu_custom_call.1} parent=0 // pred_check_branch
    %26 = sbr.rel (0) target = $region25
  $region24: #{tpu_custom_call.1} parent=0 // pred_region
    _
  $region25: #{tpu_custom_call.1} parent=0 // pred_fallthru
    _
  // Predicated region
  $region26: #{tpu_custom_call.1} parent=0 // pred_check
    _
  $region27: #{tpu_custom_call.1} parent=0 // pred_check_branch
    %28 = sbr.rel (0) target = $region29
  $region28: #{tpu_custom_call.1} parent=0 // pred_region
    _
  $region29: #{tpu_custom_call.1} parent=0 // pred_fallthru
    _
  // Predicated region
  $region30: #{tpu_custom_call.1} parent=0 // pred_check
    _
  $region31: #{tpu_custom_call.1} parent=0 // pred_check_branch
    %30 = sbr.rel (0) target = $region33
  $region32: #{tpu_custom_call.1} parent=0 // pred_region
    _
  $region33: #{tpu_custom_call.1} parent=0 // pred_fallthru
    _
  // Predicated region
  $region34: #{tpu_custom_call.1} parent=0 // pred_check
    _
  $region35: #{tpu_custom_call.1} parent=0 // pred_check_branch
    %32 = sbr.rel (0) target = $region37
  $region36: #{tpu_custom_call.1} parent=0 // pred_region
    _
  $region37: #{tpu_custom_call.1} parent=0 // pred_fallthru
    _
  // Predicated region
  $region38: #{tpu_custom_call.1} parent=0 // pred_check
    _
  $region39: #{tpu_custom_call.1} parent=0 // pred_check_branch
    %34 = sbr.rel (0) target = $region41
  $region40: #{tpu_custom_call.1} parent=0 // pred_region
    _
  $region41: #{tpu_custom_call.1} parent=0 // pred_fallthru
    _
  %v36 = vld [vmem:[%s0] sm:$0x7]
  %v37 = vld [vmem:[%s1] sm:$0xff]
  %v38 = vld [vmem:[%s1 + $0x8] sm:$0xff]
  %v39 = vld [vmem:[%s1 + $0x10] sm:$0xff]
  %v40 = vld [vmem:[%s1 + $0x18] sm:$0xff]
  %v41 = vld [vmem:[%s1 + $0x20] sm:$0xff]
  %v42 = vld [vmem:[%s1 + $0x28] sm:$0xff]
  %v43 = vld [vmem:[%s1 + $0x30] sm:$0xff]
  %v44 = vld [vmem:[%s1 + $0x38] sm:$0xff]
  %v45 = vld [vmem:[%s2] sm:$0xff]
  %v46 = vld [vmem:[%s2 + $0x8] sm:$0xff]
  %v47 = vld [vmem:[%s2 + $0x10] sm:$0xff]
  %v48 = vld [vmem:[%s2 + $0x18] sm:$0xff]
  %v49 = vld [vmem:[%s2 + $0x20] sm:$0xff]
  %v50 = vld [vmem:[%s2 + $0x28] sm:$0xff]
  %v51 = vld [vmem:[%s2 + $0x30] sm:$0xff]
  %v52 = vld [vmem:[%s2 + $0x38] sm:$0xff]
  %54 = vset.pattern.permute.xlu0 0
  %55 = vperm.xlu0 %54, %v37
  %v56 = vpop.permute.xlu0 %55
  %59 = vset.pattern.permute.xlu0 0
  %60 = vperm.xlu0 %59, %v38
  %v61 = vpop.permute.xlu0 %60
  %64 = vset.pattern.permute.xlu0 0
  %65 = vperm.xlu0 %64, %v39
  %v66 = vpop.permute.xlu0 %65
  %69 = vset.pattern.permute.xlu0 0
  %70 = vperm.xlu0 %69, %v40
  %v71 = vpop.permute.xlu0 %70
  %74 = vset.pattern.permute.xlu0 0
  %75 = vperm.xlu0 %74, %v41
  %v76 = vpop.permute.xlu0 %75
  %79 = vset.pattern.permute.xlu0 0
  %80 = vperm.xlu0 %79, %v42
  %v81 = vpop.permute.xlu0 %80
  %84 = vset.pattern.permute.xlu0 0
  %85 = vperm.xlu0 %84, %v43
  %v86 = vpop.permute.xlu0 %85
  %89 = vset.pattern.permute.xlu0 0
  %90 = vperm.xlu0 %89, %v44
  %v91 = vpop.permute.xlu0 %90
  %v93 = vlaneseq
  %v94 = vshrl.u32 %v93, 7
  %v95 = vsub.s32 0, %v94
  %v96 = vrot.slane %v36, %v95
  %v97 = vmul.f32 %v56, %v96
  %v98 = vmul.f32 %v61, %v96
  %v99 = vmul.f32 %v66, %v96
  %v100 = vmul.f32 %v71, %v96
  %v101 = vmul.f32 %v76, %v96
  %v102 = vmul.f32 %v81, %v96
  %v103 = vmul.f32 %v86, %v96
  %v104 = vmul.f32 %v91, %v96
  %105 = vset.pattern.permute.xlu0 1
  %106 = vperm.xlu0 %105, %v37
  %v107 = vpop.permute.xlu0 %106
  %109 = vset.pattern.permute.xlu0 1
  %110 = vperm.xlu0 %109, %v38
  %v111 = vpop.permute.xlu0 %110
  %113 = vset.pattern.permute.xlu0 1
  %114 = vperm.xlu0 %113, %v39
  %v115 = vpop.permute.xlu0 %114
  %117 = vset.pattern.permute.xlu0 1
  %118 = vperm.xlu0 %117, %v40
  %v119 = vpop.permute.xlu0 %118
  %121 = vset.pattern.permute.xlu0 1
  %122 = vperm.xlu0 %121, %v41
  %v123 = vpop.permute.xlu0 %122
  %125 = vset.pattern.permute.xlu0 1
  %126 = vperm.xlu0 %125, %v42
  %v127 = vpop.permute.xlu0 %126
  %129 = vset.pattern.permute.xlu0 1
  %130 = vperm.xlu0 %129, %v43
  %v131 = vpop.permute.xlu0 %130
  %133 = vset.pattern.permute.xlu0 1
  %134 = vperm.xlu0 %133, %v44
  %v135 = vpop.permute.xlu0 %134
  %v137 = vlaneseq
  %v138 = vshrl.u32 %v137, 7
  %v139 = vsub.s32 1, %v138
  %v140 = vrot.slane %v36, %v139
  %v141 = vmul.f32 %v107, %v140
  %v142 = vmul.f32 %v111, %v140
  %v143 = vmul.f32 %v115, %v140
  %v144 = vmul.f32 %v119, %v140
  %v145 = vmul.f32 %v123, %v140
  %v146 = vmul.f32 %v127, %v140
  %v147 = vmul.f32 %v131, %v140
  %v148 = vmul.f32 %v135, %v140
  %v149 = vadd.f32 %v97, %v141
  %v150 = vadd.f32 %v98, %v142
  %v151 = vadd.f32 %v99, %v143
  %v152 = vadd.f32 %v100, %v144
  %v153 = vadd.f32 %v101, %v145
  %v154 = vadd.f32 %v102, %v146
  %v155 = vadd.f32 %v103, %v147
  %v156 = vadd.f32 %v104, %v148
  %157 = vset.pattern.permute.xlu0 2
  %158 = vperm.xlu0 %157, %v37
  %v159 = vpop.permute.xlu0 %158
  %161 = vset.pattern.permute.xlu0 2
  %162 = vperm.xlu0 %161, %v38
  %v163 = vpop.permute.xlu0 %162
  %165 = vset.pattern.permute.xlu0 2
  %166 = vperm.xlu0 %165, %v39
  %v167 = vpop.permute.xlu0 %166
  %169 = vset.pattern.permute.xlu0 2
  %170 = vperm.xlu0 %169, %v40
  %v171 = vpop.permute.xlu0 %170
  %173 = vset.pattern.permute.xlu0 2
  %174 = vperm.xlu0 %173, %v41
  %v175 = vpop.permute.xlu0 %174
  %177 = vset.pattern.permute.xlu0 2
  %178 = vperm.xlu0 %177, %v42
  %v179 = vpop.permute.xlu0 %178
  %181 = vset.pattern.permute.xlu0 2
  %182 = vperm.xlu0 %181, %v43
  %v183 = vpop.permute.xlu0 %182
  %185 = vset.pattern.permute.xlu0 2
  %186 = vperm.xlu0 %185, %v44
  %v187 = vpop.permute.xlu0 %186
  %v189 = vlaneseq
  %v190 = vshrl.u32 %v189, 7
  %v191 = vsub.s32 2, %v190
  %v192 = vrot.slane %v36, %v191
  %v193 = vmul.f32 %v159, %v192
  %v194 = vmul.f32 %v163, %v192
  %v195 = vmul.f32 %v167, %v192
  %v196 = vmul.f32 %v171, %v192
  %v197 = vmul.f32 %v175, %v192
  %v198 = vmul.f32 %v179, %v192
  %v199 = vmul.f32 %v183, %v192
  %v200 = vmul.f32 %v187, %v192
  %v201 = vadd.f32 %v149, %v193
  %v202 = vadd.f32 %v150, %v194
  %v203 = vadd.f32 %v151, %v195
  %v204 = vadd.f32 %v152, %v196
  %v205 = vadd.f32 %v153, %v197
  %v206 = vadd.f32 %v154, %v198
  %v207 = vadd.f32 %v155, %v199
  %v208 = vadd.f32 %v156, %v200
  %210 = vset.pattern.permute.xlu0 0
  %211 = vperm.xlu0 %210, %v45
  %v212 = vpop.permute.xlu0 %211
  %215 = vset.pattern.permute.xlu0 0
  %216 = vperm.xlu0 %215, %v46
  %v217 = vpop.permute.xlu0 %216
  %220 = vset.pattern.permute.xlu0 0
  %221 = vperm.xlu0 %220, %v47
  %v222 = vpop.permute.xlu0 %221
  %225 = vset.pattern.permute.xlu0 0
  %226 = vperm.xlu0 %225, %v48
  %v227 = vpop.permute.xlu0 %226
  %230 = vset.pattern.permute.xlu0 0
  %231 = vperm.xlu0 %230, %v49
  %v232 = vpop.permute.xlu0 %231
  %235 = vset.pattern.permute.xlu0 0
  %236 = vperm.xlu0 %235, %v50
  %v237 = vpop.permute.xlu0 %236
  %240 = vset.pattern.permute.xlu0 0
  %241 = vperm.xlu0 %240, %v51
  %v242 = vpop.permute.xlu0 %241
  %245 = vset.pattern.permute.xlu0 0
  %246 = vperm.xlu0 %245, %v52
  %v247 = vpop.permute.xlu0 %246
  %v249 = vadd.f32 %v201, %v212
  %v250 = vadd.f32 %v202, %v217
  %v251 = vadd.f32 %v203, %v222
  %v252 = vadd.f32 %v204, %v227
  %v253 = vadd.f32 %v205, %v232
  %v254 = vadd.f32 %v206, %v237
  %v255 = vadd.f32 %v207, %v242
  %v256 = vadd.f32 %v208, %v247
  %v257 = vmax.f32 %v249, 0.0
  %v258 = vmax.f32 %v250, 0.0
  %v259 = vmax.f32 %v251, 0.0
  %v260 = vmax.f32 %v252, 0.0
  %v261 = vmax.f32 %v253, 0.0
  %v262 = vmax.f32 %v254, 0.0
  %v263 = vmax.f32 %v255, 0.0
  %v264 = vmax.f32 %v256, 0.0
  %v265 = vld [vmem:[%s3] sm:$0xf]
  %v266 = vld [vmem:[%s3 + $0x4] sm:$0xf]
  %v267 = vld [vmem:[%s3 + $0x8] sm:$0xf]
  %v268 = vld [vmem:[%s3 + $0xc] sm:$0xf]
  %v269 = vld [vmem:[%s3 + $0x10] sm:$0xf]
  %v270 = vld [vmem:[%s3 + $0x14] sm:$0xf]
  %v271 = vld [vmem:[%s3 + $0x18] sm:$0xf]
  %v272 = vld [vmem:[%s3 + $0x1c] sm:$0xf]
  %v273 = vpack.c.bf16 %v258, %v257
  %v274 = vpack.c.bf16 %v260, %v259
  %v275 = vpack.c.bf16 %v262, %v261
  %v276 = vpack.c.bf16 %v264, %v263
  %v277 = vld [vmem:[%s4] sm:$0xff]
  %v278 = vld [vmem:[%s4 + $0x8] sm:$0xff]
  %v279 = vld [vmem:[%s4 + $0x10] sm:$0xff]
  %v280 = vld [vmem:[%s4 + $0x18] sm:$0xff]
  %v281 = vld [vmem:[%s4 + $0x20] sm:$0xff]
  %v282 = vld [vmem:[%s4 + $0x28] sm:$0xff]
  %v283 = vld [vmem:[%s4 + $0x30] sm:$0xff]
  %v284 = vld [vmem:[%s4 + $0x38] sm:$0xff]
  %286 = vset.pattern.permute.xlu0 0
  %287 = vperm.xlu0 %286, %v277
  %v288 = vpop.permute.xlu0 %287
  %291 = vset.pattern.permute.xlu0 0
  %292 = vperm.xlu0 %291, %v278
  %v293 = vpop.permute.xlu0 %292
  %296 = vset.pattern.permute.xlu0 0
  %297 = vperm.xlu0 %296, %v279
  %v298 = vpop.permute.xlu0 %297
  %301 = vset.pattern.permute.xlu0 0
  %302 = vperm.xlu0 %301, %v280
  %v303 = vpop.permute.xlu0 %302
  %306 = vset.pattern.permute.xlu0 0
  %307 = vperm.xlu0 %306, %v281
  %v308 = vpop.permute.xlu0 %307
  %311 = vset.pattern.permute.xlu0 0
  %312 = vperm.xlu0 %311, %v282
  %v313 = vpop.permute.xlu0 %312
  %316 = vset.pattern.permute.xlu0 0
  %317 = vperm.xlu0 %316, %v283
  %v318 = vpop.permute.xlu0 %317
  %321 = vset.pattern.permute.xlu0 0
  %322 = vperm.xlu0 %321, %v284
  %v323 = vpop.permute.xlu0 %322
  %v333 = vunpack.c.l.b16 %v265
  %v334 = vunpack.c.l.b16 %v266
  %v335 = vunpack.c.l.b16 %v267
  %v336 = vunpack.c.l.b16 %v268
  %v337 = vunpack.c.l.b16 %v269
  %v338 = vunpack.c.l.b16 %v270
  %v339 = vunpack.c.l.b16 %v271
  %v340 = vunpack.c.l.b16 %v272
  %v341 = vpack.c.b16 %v334, %v333
  %v342 = vpack.c.b16 %v336, %v335
  %v343 = vpack.c.b16 %v338, %v337
  %v344 = vpack.c.b16 %v340, %v339
  %vm345 = vcmask 523264
  %v347 = vsel %vm345, %v341, 0
  %v350 = vsel %vm345, %v342, 0
  %v353 = vsel %vm345, %v343, 0
  %v356 = vsel %vm345, %v344, 0
  %358 = vmatprep.subr.bf16.mxu0 0
  %359 = vmatpush1.bf16.msra.mxu0 0
  %360 = vmatprep.subr.bf16.mxu0 0
  %361 = vmatpush1.bf16.msra.mxu0 0
  %362 = vmatprep.subr.bf16.mxu0 0
  %363 = vmatpush1.bf16.msra.mxu0 0
  %364 = vmatprep.subr.bf16.mxu0 0
  %365 = vmatpush1.bf16.msra.mxu0 0
  %366 = vmatprep.subr.bf16.mxu0 0
  %367 = vmatpush1.bf16.msra.mxu0 %v276
  %368 = vmatprep.subr.bf16.mxu0 0
  %369 = vmatpush1.bf16.msra.mxu0 %v275
  %370 = vmatprep.subr.bf16.mxu0 0
  %371 = vmatpush1.bf16.msra.mxu0 %v274
  %372 = vmatprep.subr.bf16.mxu0 0
  %373 = vmatpush1.bf16.msra.mxu0 %v273
  %374 = vmatprep.subr.bf16.mxu0 0
  %375 = vmatpush2.bf16.msra.mxu0 0
  %376 = vmatprep.subr.bf16.mxu0 0
  %377 = vmatpush2.bf16.msra.mxu0 0
  %378 = vmatprep.subr.bf16.mxu0 0
  %379 = vmatpush2.bf16.msra.mxu0 0
  %380 = vmatprep.subr.bf16.mxu0 0
  %381 = vmatpush2.bf16.msra.mxu0 0
  %382 = vmatprep.subr.bf16.mxu0 0
  %383 = vmatpush2.bf16.msra.mxu0 0
  %384 = vmatprep.subr.bf16.mxu0 0
  %385 = vmatpush2.bf16.msra.mxu0 0
  %386 = vmatprep.subr.bf16.mxu0 0
  %387 = vmatpush2.bf16.msra.mxu0 0
  %388 = vmatprep.subr.bf16.mxu0 0
  %389 = vmatpush2.bf16.msra.mxu0 0
  %390 = vmatprep.mubr.bf16.mxu0 0
  %391 = vmatmul.mubr.bf16.gmra.mxu0 %v347
  %v392 = vpop.f32.mrf.mxu0
  %v393 = vadd.f32 %v288, %v392
  %v394 = vpop.f32.mrf.mxu0
  %v395 = vpop.f32.mrf.mxu0
  %v396 = vadd.f32 %v293, %v395
  %v397 = vpop.f32.mrf.mxu0
  %398 = vmatprep.mubr.bf16.mxu0 0
  %399 = vmatmul.mubr.bf16.gmra.mxu0 %v350
  %v400 = vpop.f32.mrf.mxu0
  %v401 = vadd.f32 %v298, %v400
  %v402 = vpop.f32.mrf.mxu0
  %v403 = vpop.f32.mrf.mxu0
  %v404 = vadd.f32 %v303, %v403
  %v405 = vpop.f32.mrf.mxu0
  %406 = vmatprep.mubr.bf16.mxu0 0
  %407 = vmatmul.mubr.bf16.gmra.mxu0 %v353
  %v408 = vpop.f32.mrf.mxu0
  %v409 = vadd.f32 %v308, %v408
  %v410 = vpop.f32.mrf.mxu0
  %v411 = vpop.f32.mrf.mxu0
  %v412 = vadd.f32 %v313, %v411
  %v413 = vpop.f32.mrf.mxu0
  %414 = vmatprep.mubr.bf16.mxu0 0
  %415 = vmatmul.mubr.bf16.gmra.mxu0 %v356
  %v416 = vpop.f32.mrf.mxu0
  %v417 = vadd.f32 %v318, %v416
  %v418 = vpop.f32.mrf.mxu0
  %v419 = vpop.f32.mrf.mxu0
  %v420 = vadd.f32 %v323, %v419
  %v421 = vpop.f32.mrf.mxu0
  %422 = vdwg.mxu0
  %v423 = vld [vmem:[%s7] sm:$0xff]
  %v424 = vld [vmem:[%s7 + $0x8] sm:$0xff]
  %v425 = vld [vmem:[%s7 + $0x10] sm:$0xff]
  %v426 = vld [vmem:[%s7 + $0x18] sm:$0xff]
  %v427 = vld [vmem:[%s7 + $0x20] sm:$0xff]
  %v428 = vld [vmem:[%s7 + $0x28] sm:$0xff]
  %v429 = vld [vmem:[%s7 + $0x30] sm:$0xff]
  %v430 = vld [vmem:[%s7 + $0x38] sm:$0xff]
  %v431 = vld [vmem:[%s6] sm:$0xf]
  %v432 = vld [vmem:[%s6 + $0x4] sm:$0xf]
  %v433 = vld [vmem:[%s6 + $0x8] sm:$0xf]
  %v434 = vld [vmem:[%s6 + $0xc] sm:$0xf]
  %v435 = vld [vmem:[%s6 + $0x10] sm:$0xf]
  %v436 = vld [vmem:[%s6 + $0x14] sm:$0xf]
  %v437 = vld [vmem:[%s6 + $0x18] sm:$0xf]
  %v438 = vld [vmem:[%s6 + $0x1c] sm:$0xf]
  %v439 = vlaneseq
  %v440 = vand.u32 %v439, 127
  %vm441 = vcmp.ge.s32.totalorder %v440, 0
  %vm442 = vcmp.lt.s32.totalorder %v440, 16
  %vm443 = vmand %vm441, %vm442
  %v444 = vsel %vm443, %v393, -inf
  %v445 = vsel %vm443, %v396, -inf
  %v446 = vsel %vm443, %v401, -inf
  %v447 = vsel %vm443, %v404, -inf
  %v448 = vsel %vm443, %v409, -inf
  %v449 = vsel %vm443, %v412, -inf
  %v450 = vsel %vm443, %v417, -inf
  %v451 = vsel %vm443, %v420, -inf
  %vm452 = vcmask 261120
  %v453 = vsel %vm452, %v444, -inf
  %454 = vmax.xlane.f32.xlu0 %v453
  %v455 = vpop.xlane.xlu0 %454
  %v456 = vsel %vm452, %v445, -inf
  %457 = vmax.xlane.f32.xlu0 %v456
  %v458 = vpop.xlane.xlu0 %457
  %v459 = vsel %vm452, %v446, -inf
  %460 = vmax.xlane.f32.xlu0 %v459
  %v461 = vpop.xlane.xlu0 %460
  %v462 = vsel %vm452, %v447, -inf
  %463 = vmax.xlane.f32.xlu0 %v462
  %v464 = vpop.xlane.xlu0 %463
  %v465 = vsel %vm452, %v448, -inf
  %466 = vmax.xlane.f32.xlu0 %v465
  %v467 = vpop.xlane.xlu0 %466
  %v468 = vsel %vm452, %v449, -inf
  %469 = vmax.xlane.f32.xlu0 %v468
  %v470 = vpop.xlane.xlu0 %469
  %v471 = vsel %vm452, %v450, -inf
  %472 = vmax.xlane.f32.xlu0 %v471
  %v473 = vpop.xlane.xlu0 %472
  %v474 = vsel %vm452, %v451, -inf
  %475 = vmax.xlane.f32.xlu0 %v474
  %v476 = vpop.xlane.xlu0 %475
  %v477 = vpack.c.bf16 %v458, %v455
  %v478 = vpack.c.bf16 %v464, %v461
  %v479 = vpack.c.bf16 %v470, %v467
  %v480 = vpack.c.bf16 %v476, %v473
  %v489 = vunpack.c.l.b16 %v431
  %v490 = vunpack.c.l.b16 %v432
  %v491 = vunpack.c.l.b16 %v433
  %v492 = vunpack.c.l.b16 %v434
  %v493 = vunpack.c.l.b16 %v435
  %v494 = vunpack.c.l.b16 %v436
  %v495 = vunpack.c.l.b16 %v437
  %v496 = vunpack.c.l.b16 %v438
  %v497 = vpack.c.b16 %v490, %v489
  %v498 = vpack.c.b16 %v492, %v491
  %v499 = vpack.c.b16 %v494, %v493
  %v500 = vpack.c.b16 %v496, %v495
  %v502 = vsel %vm345, %v497, 0
  %v505 = vsel %vm345, %v498, 0
  %v508 = vsel %vm345, %v499, 0
  %v511 = vsel %vm345, %v500, 0
  %513 = vmatprep.subr.bf16.mxu0 0
  %514 = vmatpush1.bf16.msra.mxu0 0
  %515 = vmatprep.subr.bf16.mxu0 0
  %516 = vmatpush1.bf16.msra.mxu0 0
  %517 = vmatprep.subr.bf16.mxu0 0
  %518 = vmatpush1.bf16.msra.mxu0 0
  %519 = vmatprep.subr.bf16.mxu0 0
  %520 = vmatpush1.bf16.msra.mxu0 0
  %521 = vmatprep.subr.bf16.mxu0 0
  %522 = vmatpush1.bf16.msra.mxu0 %v480
  %523 = vmatprep.subr.bf16.mxu0 0
  %524 = vmatpush1.bf16.msra.mxu0 %v479
  %525 = vmatprep.subr.bf16.mxu0 0
  %526 = vmatpush1.bf16.msra.mxu0 %v478
  %527 = vmatprep.subr.bf16.mxu0 0
  %528 = vmatpush1.bf16.msra.mxu0 %v477
  %529 = vmatprep.subr.bf16.mxu0 0
  %530 = vmatpush2.bf16.msra.mxu0 0
  %531 = vmatprep.subr.bf16.mxu0 0
  %532 = vmatpush2.bf16.msra.mxu0 0
  %533 = vmatprep.subr.bf16.mxu0 0
  %534 = vmatpush2.bf16.msra.mxu0 0
  %535 = vmatprep.subr.bf16.mxu0 0
  %536 = vmatpush2.bf16.msra.mxu0 0
  %537 = vmatprep.subr.bf16.mxu0 0
  %538 = vmatpush2.bf16.msra.mxu0 0
  %539 = vmatprep.subr.bf16.mxu0 0
  %540 = vmatpush2.bf16.msra.mxu0 0
  %541 = vmatprep.subr.bf16.mxu0 0
  %542 = vmatpush2.bf16.msra.mxu0 0
  %543 = vmatprep.subr.bf16.mxu0 0
  %544 = vmatpush2.bf16.msra.mxu0 0
  %545 = vmatprep.mubr.bf16.mxu0 0
  %546 = vmatmul.mubr.bf16.gmra.mxu0 %v502
  %v547 = vpop.f32.mrf.mxu0
  %v548 = vadd.f32 %v423, %v547
  %v549 = vpop.f32.mrf.mxu0
  %v550 = vpop.f32.mrf.mxu0
  %v551 = vadd.f32 %v424, %v550
  %v552 = vpop.f32.mrf.mxu0
  %553 = vmatprep.mubr.bf16.mxu0 0
  %554 = vmatmul.mubr.bf16.gmra.mxu0 %v505
  %v555 = vpop.f32.mrf.mxu0
  %v556 = vadd.f32 %v425, %v555
  %v557 = vpop.f32.mrf.mxu0
  %v558 = vpop.f32.mrf.mxu0
  %v559 = vadd.f32 %v426, %v558
  %v560 = vpop.f32.mrf.mxu0
  %561 = vmatprep.mubr.bf16.mxu0 0
  %562 = vmatmul.mubr.bf16.gmra.mxu0 %v508
  %v563 = vpop.f32.mrf.mxu0
  %v564 = vadd.f32 %v427, %v563
  %v565 = vpop.f32.mrf.mxu0
  %v566 = vpop.f32.mrf.mxu0
  %v567 = vadd.f32 %v428, %v566
  %v568 = vpop.f32.mrf.mxu0
  %569 = vmatprep.mubr.bf16.mxu0 0
  %570 = vmatmul.mubr.bf16.gmra.mxu0 %v511
  %v571 = vpop.f32.mrf.mxu0
  %v572 = vadd.f32 %v429, %v571
  %v573 = vpop.f32.mrf.mxu0
  %v574 = vpop.f32.mrf.mxu0
  %v575 = vadd.f32 %v430, %v574
  %v576 = vpop.f32.mrf.mxu0
  %577 = vdwg.mxu0
  %579 = vset.pattern.permute.xlu0 0
  %580 = vperm.xlu0 %579, %v548
  %v581 = vpop.permute.xlu0 %580
  %584 = vset.pattern.permute.xlu0 0
  %585 = vperm.xlu0 %584, %v551
  %v586 = vpop.permute.xlu0 %585
  %589 = vset.pattern.permute.xlu0 0
  %590 = vperm.xlu0 %589, %v556
  %v591 = vpop.permute.xlu0 %590
  %594 = vset.pattern.permute.xlu0 0
  %595 = vperm.xlu0 %594, %v559
  %v596 = vpop.permute.xlu0 %595
  %599 = vset.pattern.permute.xlu0 0
  %600 = vperm.xlu0 %599, %v564
  %v601 = vpop.permute.xlu0 %600
  %604 = vset.pattern.permute.xlu0 0
  %605 = vperm.xlu0 %604, %v567
  %v606 = vpop.permute.xlu0 %605
  %609 = vset.pattern.permute.xlu0 0
  %610 = vperm.xlu0 %609, %v572
  %v611 = vpop.permute.xlu0 %610
  %614 = vset.pattern.permute.xlu0 0
  %615 = vperm.xlu0 %614, %v575
  %v616 = vpop.permute.xlu0 %615
  %v618 = vsel %vm443, %v581, 0.0
  %v619 = vsel %vm443, %v586, 0.0
  %v620 = vsel %vm443, %v591, 0.0
  %v621 = vsel %vm443, %v596, 0.0
  %v622 = vsel %vm443, %v601, 0.0
  %v623 = vsel %vm443, %v606, 0.0
  %v624 = vsel %vm443, %v611, 0.0
  %v625 = vsel %vm443, %v616, 0.0
  %vm626 = vcmp.ge.s32.totalorder %v440, 16
  %vm627 = vcmp.lt.s32.totalorder %v440, 32
  %vm628 = vmand %vm626, %vm627
  %v629 = vsel %vm628, %v393, -inf
  %v630 = vsel %vm628, %v396, -inf
  %v631 = vsel %vm628, %v401, -inf
  %v632 = vsel %vm628, %v404, -inf
  %v633 = vsel %vm628, %v409, -inf
  %v634 = vsel %vm628, %v412, -inf
  %v635 = vsel %vm628, %v417, -inf
  %v636 = vsel %vm628, %v420, -inf
  %v637 = vsel %vm452, %v629, -inf
  %638 = vmax.xlane.f32.xlu0 %v637
  %v639 = vpop.xlane.xlu0 %638
  %v640 = vsel %vm452, %v630, -inf
  %641 = vmax.xlane.f32.xlu0 %v640
  %v642 = vpop.xlane.xlu0 %641
  %v643 = vsel %vm452, %v631, -inf
  %644 = vmax.xlane.f32.xlu0 %v643
  %v645 = vpop.xlane.xlu0 %644
  %v646 = vsel %vm452, %v632, -inf
  %647 = vmax.xlane.f32.xlu0 %v646
  %v648 = vpop.xlane.xlu0 %647
  %v649 = vsel %vm452, %v633, -inf
  %650 = vmax.xlane.f32.xlu0 %v649
  %v651 = vpop.xlane.xlu0 %650
  %v652 = vsel %vm452, %v634, -inf
  %653 = vmax.xlane.f32.xlu0 %v652
  %v654 = vpop.xlane.xlu0 %653
  %v655 = vsel %vm452, %v635, -inf
  %656 = vmax.xlane.f32.xlu0 %v655
  %v657 = vpop.xlane.xlu0 %656
  %v658 = vsel %vm452, %v636, -inf
  %659 = vmax.xlane.f32.xlu0 %v658
  %v660 = vpop.xlane.xlu0 %659
  %v661 = vpack.c.bf16 %v642, %v639
  %v662 = vpack.c.bf16 %v648, %v645
  %v663 = vpack.c.bf16 %v654, %v651
  %v664 = vpack.c.bf16 %v660, %v657
  %665 = vmatprep.subr.bf16.mxu0 0
  %666 = vmatpush1.bf16.msra.mxu0 0
  %667 = vmatprep.subr.bf16.mxu0 0
  %668 = vmatpush1.bf16.msra.mxu0 0
  %669 = vmatprep.subr.bf16.mxu0 0
  %670 = vmatpush1.bf16.msra.mxu0 0
  %671 = vmatprep.subr.bf16.mxu0 0
  %672 = vmatpush1.bf16.msra.mxu0 0
  %673 = vmatprep.subr.bf16.mxu0 0
  %674 = vmatpush1.bf16.msra.mxu0 %v664
  %675 = vmatprep.subr.bf16.mxu0 0
  %676 = vmatpush1.bf16.msra.mxu0 %v663
  %677 = vmatprep.subr.bf16.mxu0 0
  %678 = vmatpush1.bf16.msra.mxu0 %v662
  %679 = vmatprep.subr.bf16.mxu0 0
  %680 = vmatpush1.bf16.msra.mxu0 %v661
  %681 = vmatprep.subr.bf16.mxu0 0
  %682 = vmatpush2.bf16.msra.mxu0 0
  %683 = vmatprep.subr.bf16.mxu0 0
  %684 = vmatpush2.bf16.msra.mxu0 0
  %685 = vmatprep.subr.bf16.mxu0 0
  %686 = vmatpush2.bf16.msra.mxu0 0
  %687 = vmatprep.subr.bf16.mxu0 0
  %688 = vmatpush2.bf16.msra.mxu0 0
  %689 = vmatprep.subr.bf16.mxu0 0
  %690 = vmatpush2.bf16.msra.mxu0 0
  %691 = vmatprep.subr.bf16.mxu0 0
  %692 = vmatpush2.bf16.msra.mxu0 0
  %693 = vmatprep.subr.bf16.mxu0 0
  %694 = vmatpush2.bf16.msra.mxu0 0
  %695 = vmatprep.subr.bf16.mxu0 0
  %696 = vmatpush2.bf16.msra.mxu0 0
  %697 = vmatprep.mubr.bf16.mxu0 0
  %698 = vmatmul.mubr.bf16.gmra.mxu0 %v502
  %v699 = vpop.f32.mrf.mxu0
  %v700 = vadd.f32 %v423, %v699
  %v701 = vpop.f32.mrf.mxu0
  %v702 = vpop.f32.mrf.mxu0
  %v703 = vadd.f32 %v424, %v702
  %v704 = vpop.f32.mrf.mxu0
  %705 = vmatprep.mubr.bf16.mxu0 0
  %706 = vmatmul.mubr.bf16.gmra.mxu0 %v505
  %v707 = vpop.f32.mrf.mxu0
  %v708 = vadd.f32 %v425, %v707
  %v709 = vpop.f32.mrf.mxu0
  %v710 = vpop.f32.mrf.mxu0
  %v711 = vadd.f32 %v426, %v710
  %v712 = vpop.f32.mrf.mxu0
  %713 = vmatprep.mubr.bf16.mxu0 0
  %714 = vmatmul.mubr.bf16.gmra.mxu0 %v508
  %v715 = vpop.f32.mrf.mxu0
  %v716 = vadd.f32 %v427, %v715
  %v717 = vpop.f32.mrf.mxu0
  %v718 = vpop.f32.mrf.mxu0
  %v719 = vadd.f32 %v428, %v718
  %v720 = vpop.f32.mrf.mxu0
  %721 = vmatprep.mubr.bf16.mxu0 0
  %722 = vmatmul.mubr.bf16.gmra.mxu0 %v511
  %v723 = vpop.f32.mrf.mxu0
  %v724 = vadd.f32 %v429, %v723
  %v725 = vpop.f32.mrf.mxu0
  %v726 = vpop.f32.mrf.mxu0
  %v727 = vadd.f32 %v430, %v726
  %v728 = vpop.f32.mrf.mxu0
  %729 = vdwg.mxu0
  %731 = vset.pattern.permute.xlu0 0
  %732 = vperm.xlu0 %731, %v700
  %v733 = vpop.permute.xlu0 %732
  %736 = vset.pattern.permute.xlu0 0
  %737 = vperm.xlu0 %736, %v703
  %v738 = vpop.permute.xlu0 %737
  %741 = vset.pattern.permute.xlu0 0
  %742 = vperm.xlu0 %741, %v708
  %v743 = vpop.permute.xlu0 %742
  %746 = vset.pattern.permute.xlu0 0
  %747 = vperm.xlu0 %746, %v711
  %v748 = vpop.permute.xlu0 %747
  %751 = vset.pattern.permute.xlu0 0
  %752 = vperm.xlu0 %751, %v716
  %v753 = vpop.permute.xlu0 %752
  %756 = vset.pattern.permute.xlu0 0
  %757 = vperm.xlu0 %756, %v719
  %v758 = vpop.permute.xlu0 %757
  %761 = vset.pattern.permute.xlu0 0
  %762 = vperm.xlu0 %761, %v724
  %v763 = vpop.permute.xlu0 %762
  %766 = vset.pattern.permute.xlu0 0
  %767 = vperm.xlu0 %766, %v727
  %v768 = vpop.permute.xlu0 %767
  %v770 = vsel %vm628, %v733, %v618
  %v771 = vsel %vm628, %v738, %v619
  %v772 = vsel %vm628, %v743, %v620
  %v773 = vsel %vm628, %v748, %v621
  %v774 = vsel %vm628, %v753, %v622
  %v775 = vsel %vm628, %v758, %v623
  %v776 = vsel %vm628, %v763, %v624
  %v777 = vsel %vm628, %v768, %v625
  %v778 = vld [vmem:[%s5] sm:$0xf]
  %v779 = vld [vmem:[%s5 + $0x4] sm:$0xf]
  %v780 = vld [vmem:[%s5 + $0x8] sm:$0xf]
  %v781 = vld [vmem:[%s5 + $0xc] sm:$0xf]
  %v782 = vld [vmem:[%s5 + $0x10] sm:$0xf]
  %v783 = vld [vmem:[%s5 + $0x14] sm:$0xf]
  %v784 = vld [vmem:[%s5 + $0x18] sm:$0xf]
  %v785 = vld [vmem:[%s5 + $0x1c] sm:$0xf]
  %v786 = vpack.c.bf16 %v396, %v393
  %v787 = vpack.c.bf16 %v404, %v401
  %v788 = vpack.c.bf16 %v412, %v409
  %v789 = vpack.c.bf16 %v420, %v417
  %v798 = vunpack.c.l.b16 %v778
  %v799 = vunpack.c.l.b16 %v779
  %v800 = vunpack.c.l.b16 %v780
  %v801 = vunpack.c.l.b16 %v781
  %v802 = vunpack.c.l.b16 %v782
  %v803 = vunpack.c.l.b16 %v783
  %v804 = vunpack.c.l.b16 %v784
  %v805 = vunpack.c.l.b16 %v785
  %v806 = vpack.c.b16 %v799, %v798
  %v807 = vpack.c.b16 %v801, %v800
  %v808 = vpack.c.b16 %v803, %v802
  %v809 = vpack.c.b16 %v805, %v804
  %v811 = vsel %vm345, %v806, 0
  %v814 = vsel %vm345, %v807, 0
  %v817 = vsel %vm345, %v808, 0
  %v820 = vsel %vm345, %v809, 0
  %822 = vmatprep.subr.bf16.mxu0 0
  %823 = vmatpush1.bf16.msra.mxu0 0
  %824 = vmatprep.subr.bf16.mxu0 0
  %825 = vmatpush1.bf16.msra.mxu0 0
  %826 = vmatprep.subr.bf16.mxu0 0
  %827 = vmatpush1.bf16.msra.mxu0 0
  %828 = vmatprep.subr.bf16.mxu0 0
  %829 = vmatpush1.bf16.msra.mxu0 0
  %830 = vmatprep.subr.bf16.mxu0 0
  %831 = vmatpush1.bf16.msra.mxu0 %v789
  %832 = vmatprep.subr.bf16.mxu0 0
  %833 = vmatpush1.bf16.msra.mxu0 %v788
  %834 = vmatprep.subr.bf16.mxu0 0
  %835 = vmatpush1.bf16.msra.mxu0 %v787
  %836 = vmatprep.subr.bf16.mxu0 0
  %837 = vmatpush1.bf16.msra.mxu0 %v786
  %838 = vmatprep.subr.bf16.mxu0 0
  %839 = vmatpush2.bf16.msra.mxu0 0
  %840 = vmatprep.subr.bf16.mxu0 0
  %841 = vmatpush2.bf16.msra.mxu0 0
  %842 = vmatprep.subr.bf16.mxu0 0
  %843 = vmatpush2.bf16.msra.mxu0 0
  %844 = vmatprep.subr.bf16.mxu0 0
  %845 = vmatpush2.bf16.msra.mxu0 0
  %846 = vmatprep.subr.bf16.mxu0 0
  %847 = vmatpush2.bf16.msra.mxu0 0
  %848 = vmatprep.subr.bf16.mxu0 0
  %849 = vmatpush2.bf16.msra.mxu0 0
  %850 = vmatprep.subr.bf16.mxu0 0
  %851 = vmatpush2.bf16.msra.mxu0 0
  %852 = vmatprep.subr.bf16.mxu0 0
  %853 = vmatpush2.bf16.msra.mxu0 0
  %854 = vmatprep.mubr.bf16.mxu0 0
  %855 = vmatmul.mubr.bf16.gmra.mxu0 %v811
  %v856 = vpop.f32.mrf.mxu0
  %v857 = vadd.f32 %v770, %v856
  %v858 = vpop.f32.mrf.mxu0
  %v859 = vpop.f32.mrf.mxu0
  %v860 = vadd.f32 %v771, %v859
  %v861 = vpop.f32.mrf.mxu0
  %862 = vmatprep.mubr.bf16.mxu0 0
  %863 = vmatmul.mubr.bf16.gmra.mxu0 %v814
  %v864 = vpop.f32.mrf.mxu0
  %v865 = vadd.f32 %v772, %v864
  %v866 = vpop.f32.mrf.mxu0
  %v867 = vpop.f32.mrf.mxu0
  %v868 = vadd.f32 %v773, %v867
  %v869 = vpop.f32.mrf.mxu0
  %870 = vmatprep.mubr.bf16.mxu0 0
  %871 = vmatmul.mubr.bf16.gmra.mxu0 %v817
  %v872 = vpop.f32.mrf.mxu0
  %v873 = vadd.f32 %v774, %v872
  %v874 = vpop.f32.mrf.mxu0
  %v875 = vpop.f32.mrf.mxu0
  %v876 = vadd.f32 %v775, %v875
  %v877 = vpop.f32.mrf.mxu0
  %878 = vmatprep.mubr.bf16.mxu0 0
  %879 = vmatmul.mubr.bf16.gmra.mxu0 %v820
  %v880 = vpop.f32.mrf.mxu0
  %v881 = vadd.f32 %v776, %v880
  %v882 = vpop.f32.mrf.mxu0
  %v883 = vpop.f32.mrf.mxu0
  %v884 = vadd.f32 %v777, %v883
  %v885 = vpop.f32.mrf.mxu0
  %886 = vdwg.mxu0
  %v887 = vmax.f32 %v857, 0.0
  %v888 = vmax.f32 %v860, 0.0
  %v889 = vmax.f32 %v865, 0.0
  %v890 = vmax.f32 %v868, 0.0
  %v891 = vmax.f32 %v873, 0.0
  %v892 = vmax.f32 %v876, 0.0
  %v893 = vmax.f32 %v881, 0.0
  %v894 = vmax.f32 %v884, 0.0
  %v895 = vld [vmem:[%s8] sm:$0x3]
  %v896 = vpack.c.bf16 %v888, %v887
  %v897 = vpack.c.bf16 %v890, %v889
  %v898 = vpack.c.bf16 %v892, %v891
  %v899 = vpack.c.bf16 %v894, %v893
  %v900 = vld [vmem:[%s9] sm:$0x7]
  %902 = vset.pattern.permute.xlu0 0
  %903 = vperm.xlu0 %902, %v900
  %v904 = vpop.permute.xlu0 %903
  %v907 = vsel %vm345, %v895, 0
  %909 = vmatprep.subr.bf16.mxu0 0
  %910 = vmatpush1.bf16.msra.mxu0 0
  %911 = vmatprep.subr.bf16.mxu0 0
  %912 = vmatpush1.bf16.msra.mxu0 0
  %913 = vmatprep.subr.bf16.mxu0 0
  %914 = vmatpush1.bf16.msra.mxu0 0
  %915 = vmatprep.subr.bf16.mxu0 0
  %916 = vmatpush1.bf16.msra.mxu0 0
  %917 = vmatprep.subr.bf16.mxu0 0
  %918 = vmatpush1.bf16.msra.mxu0 %v899
  %919 = vmatprep.subr.bf16.mxu0 0
  %920 = vmatpush1.bf16.msra.mxu0 %v898
  %921 = vmatprep.subr.bf16.mxu0 0
  %922 = vmatpush1.bf16.msra.mxu0 %v897
  %923 = vmatprep.subr.bf16.mxu0 0
  %924 = vmatpush1.bf16.msra.mxu0 %v896
  %925 = vmatprep.subr.bf16.mxu0 0
  %926 = vmatpush2.bf16.msra.mxu0 0
  %927 = vmatprep.subr.bf16.mxu0 0
  %928 = vmatpush2.bf16.msra.mxu0 0
  %929 = vmatprep.subr.bf16.mxu0 0
  %930 = vmatpush2.bf16.msra.mxu0 0
  %931 = vmatprep.subr.bf16.mxu0 0
  %932 = vmatpush2.bf16.msra.mxu0 0
  %933 = vmatprep.subr.bf16.mxu0 0
  %934 = vmatpush2.bf16.msra.mxu0 0
  %935 = vmatprep.subr.bf16.mxu0 0
  %936 = vmatpush2.bf16.msra.mxu0 0
  %937 = vmatprep.subr.bf16.mxu0 0
  %938 = vmatpush2.bf16.msra.mxu0 0
  %939 = vmatprep.subr.bf16.mxu0 0
  %940 = vmatpush2.bf16.msra.mxu0 0
  %941 = vmatprep.mubr.bf16.mxu0 0
  %942 = vmatmul.mubr.bf16.gmra.mxu0 %v907
  %v943 = vpop.f32.mrf.mxu0
  %v944 = vadd.f32 %v904, %v943
  %v945 = vpop.f32.mrf.mxu0
  %v946 = vpop.f32.mrf.mxu0
  %v947 = vpop.f32.mrf.mxu0
  %948 = vdwg.mxu0
  %v949 = vmax.f32 %v944, 0.0
  %v950 = vadd.f32 %v36, %v949
  %vm951 = vcmask 256000
  %952 = vst.msk [vmem:[%s10] sm:$0x7] %vm951, %v950
  // Predicated region
  $region42: #{tpu_custom_call.1} parent=0 // pred_check
    _
  $region43: #{tpu_custom_call.1} parent=0 // pred_check_branch
    %954 = sbr.rel (0) target = $region45
  $region44: #{tpu_custom_call.1} parent=0 // pred_region
    _
  $region45: #{tpu_custom_call.1} parent=0 // pred_fallthru
    _
  // Predicated region
  $region46: #{tpu_custom_call.1} parent=0 // pred_check
    _
  $region47: #{tpu_custom_call.1} parent=0 // pred_check_branch
    %956 = sbr.rel (0) target = $region49
  $region48: #{tpu_custom_call.1} parent=0 // pred_region
    _
  $region49: #{tpu_custom_call.1} parent=0 // pred_fallthru
    _

</llo_original>
